<compile_context>
chip_gen: v6e
topology: v6e:2x2x1
jax: 0.10.0
libtpu: 0.0.40
codegen_flags: <defaults>
</compile_context>

<pallas_src>
import jax
import jax.numpy as jnp
from jax import lax
from jax.experimental import pallas as pl
from jax.experimental.pallas import tpu as pltpu


def _divisors(n):
    return [d for d in range(1, n + 1) if n % d == 0]


def _round_up(v, m):
    return ((v + m - 1) // m) * m


def _budgets():
    """Generation-aware scoped-VMEM limit and padded per-x-block budget."""
    try:
        vmem_cap = int(pltpu.get_tpu_info().vmem_capacity_bytes)
    except Exception:
        vmem_cap = 64 * 1024 * 1024          # conservative: v7x physical VMEM
    if vmem_cap >= 100 * 1024 * 1024:        # v5e / v6e: 128 MiB physical
        return 100 * 1024 * 1024, 16 * 1024 * 1024
    # v7x: 64 MiB physical -> leave headroom for 2x x-block, output, constants.
    return 48 * 1024 * 1024, 10 * 1024 * 1024


def _plan(N, C, hw, itemsize):
    """Pick (nb, ct, vmem_limit) using PADDED (8,128)-tile VMEM footprints."""
    vmem_limit, block_budget = _budgets()

    def padded_x_bytes(nb, ct):
        # x block (nb, ct, hw): ct on sublanes (round to 8), hw on lanes (round to 128).
        return nb * _round_up(ct, 8) * _round_up(hw, 128) * itemsize

    # Channel tile: full C, or a proper divisor that is a multiple of 128 (keeps
    # both the input sublane dim and the lane-dense output BlockSpec legal).
    legal_ct = [C] + [d for d in _divisors(C) if d % 128 == 0 and d != C]
    fitting = [ct for ct in legal_ct if padded_x_bytes(1, ct) <= block_budget]
    ct = max(fitting) if fitting else min(legal_ct)   # best-effort fallback

    # Batch tile: as many samples per grid step as fit the padded budget
    # (capped to keep the static unroll small).
    cands = [d for d in _divisors(N) if d <= 32 and padded_x_bytes(d, ct) <= block_budget]
    nb = max(cands) if cands else 1

    # Guarantee >= 2 "parallel" grid steps (v7x dual TensorCore) without
    # shrinking the DMA more than necessary: split N first, C (128-multiples) second.
    if (N // nb) * (C // ct) < 2:
        if N > 1:
            nb = max(d for d in _divisors(N) if d < N)
        else:
            smaller = [c for c in legal_ct if c < ct]
            if smaller:
                ct = max(smaller)
    return nb, ct, vmem_limit


def _pool_transpose_kernel(x_ref, p_ref, i_ref, o_ref):
    # x_ref: (nb, ct, H*W)   input slab (lane-dense minor dim H*W)
    # p_ref: (H*W, W)        bf16 comb matrix, p[h*W+w', w] = (w' == w)
    # i_ref: (cs, cs)        bf16 identity, cs = min(128, C)
    # o_ref: (nb, W, ct)     output block (lane-dense when ct % 128 == 0)
    nb, ct, hw = x_ref.shape
    w = p_ref.shape[1]
    cs = i_ref.shape[0]
    inv_h = 1.0 / float(hw // w)
    pool = p_ref[...]
    ident = i_ref[...]
    for s in range(nb):                               # static unroll over samples
        xs = x_ref[s].astype(jnp.bfloat16)            # (ct, hw)
        # Stage 1: H-sum via canonical MXU matmul, K = H*W (lane-dense operand).
        y = lax.dot_general(xs, pool,
                            dimension_numbers=(((1,), (0,)), ((), ())),
                            preferred_element_type=jnp.float32)     # (ct, W)
        y = y * inv_h                                               # f32 mean
        # Stage 2: transpose (ct, W) -> (W, ct) in <=128-wide chunks via a
        # trans-A identity matmul (no XLU transpose, lane-aligned stores).
        off = 0
        while off < ct:                               # static unroll over chunks
            sz = min(cs, ct - off)
            out = lax.dot_general(y[off:off + sz, :].astype(jnp.bfloat16),
                                  ident[:sz, :sz],
                                  dimension_numbers=(((0,), (0,)), ((), ())),
                                  preferred_element_type=jnp.float32)  # (W, sz)
            o_ref[s, :, off:off + sz] = out.astype(o_ref.dtype)
            off += sz


@jax.jit
def vgg_forward(x):
    """x: (N, C, H, W) -> (N, W, C) ==
    AdaptiveAvgPool2d((None, 1))(x.permute(0, 3, 1, 2)).squeeze(3), net == identity."""
    N, C, H, W = x.shape
    hw = H * W
    itemsize = x.dtype.itemsize
    nb, ct, vmem_limit = _plan(N, C, hw, itemsize)
    cs = min(128, C)

    x2 = jnp.reshape(x, (N, C, hw))                           # free (contiguous) view
    comb = jnp.tile(jnp.eye(W, dtype=jnp.bfloat16), (H, 1))   # (H*W, W), exact 0/1
    ident = jnp.eye(cs, dtype=jnp.bfloat16)                   # (cs, cs), exact 0/1

    grid = (N // nb, C // ct)
    bytes_accessed = (N * C * hw + N * W * C) * itemsize + comb.size * 2 + ident.size * 2
    flops = 2 * N * C * hw + 2 * N * C * W * cs               # pooling + transpose MACs

    return pl.pallas_call(
        _pool_transpose_kernel,
        out_shape=jax.ShapeDtypeStruct((N, W, C), x.dtype),
        grid_spec=pl.GridSpec(
            grid=grid,
            in_specs=[
                pl.BlockSpec((nb, ct, hw), lambda n, c: (n, c, 0)),
                pl.BlockSpec((hw, W), lambda n, c: (0, 0)),   # resident constant
                pl.BlockSpec((cs, cs), lambda n, c: (0, 0)),  # resident constant
            ],
            out_specs=pl.BlockSpec((nb, W, ct), lambda n, c: (n, 0, c)),
        ),
        compiler_params=pltpu.CompilerParams(
            dimension_semantics=("parallel", "parallel"),
            vmem_limit_bytes=vmem_limit,
        ),
        cost_estimate=pl.CostEstimate(
            flops=flops, transcendentals=0, bytes_accessed=bytes_accessed),
    )(x2, comb, ident)


if __name__ == "__main__":
    key = jax.random.PRNGKey(0)
    k0, k1 = jax.random.split(key)

    # Small shape consistent with the module: x = (N, C, H, W).
    N, C, H, W = 2, 4, 16, 16
    x = jax.random.normal(k0, (N, C, H, W), dtype=jnp.float32)
    out = jax.block_until_ready(vgg_forward(x))
    # Pure-JAX reference of the PyTorch forward (net == identity):
    # permute(0,3,1,2) -> (N,W,C,H); AdaptiveAvgPool2d((None,1)) -> mean over H; squeeze.
    ref = jnp.transpose(jnp.mean(x, axis=2), (0, 2, 1))
    assert out.shape == (N, W, C)
    # bf16 MXU operands (documented accuracy): ~1e-3 relative error budget.
    assert jnp.allclose(out, ref, atol=2e-2, rtol=2e-2), float(jnp.max(jnp.abs(out - ref)))

    # VGG-like channel count: exercises the lane-dense (C % 128 == 0) chunked path
    # and the >=2-parallel-steps split (N == 1 -> C split into 2 x 128).
    N2, C2, H2, W2 = 1, 256, 8, 8
    x2 = jax.random.normal(k1, (N2, C2, H2, W2), dtype=jnp.float32)
    out2 = jax.block_until_ready(vgg_forward(x2))
    ref2 = jnp.transpose(jnp.mean(x2, axis=2), (0, 2, 1))
    assert out2.shape == (N2, W2, C2)
    assert jnp.allclose(out2, ref2, atol=2e-2, rtol=2e-2), float(jnp.max(jnp.abs(out2 - ref2)))

    print("KERNEL_OK")
</pallas_src>

<mosaic_0001>
module attributes {stable_mosaic.version = 11 : i64} {
  func.func @_pool_transpose_kernel(%arg0: i32, %arg1: i32, %arg2: memref<1x4x256xf32, #tpu.memory_space<vmem>>, %arg3: memref<256x16xbf16, #tpu.memory_space<vmem>>, %arg4: memref<4x4xbf16, #tpu.memory_space<vmem>>, %arg5: memref<1x16x4xf32, #tpu.memory_space<vmem>>) attributes {dimension_semantics = [#tpu.dimension_semantics<parallel>, #tpu.dimension_semantics<parallel>], iteration_bounds = array<i64: 2, 1>, scalar_prefetch = 0 : i64, scratch_operands = 0 : i64, tpu.core_type = #tpu.core_type<tc>, window_params = [{transform_indices = @transform_0, window_bounds = array<i64: 1, 4, 256>}, {pipeline_mode = #tpu.pipeline_mode<synchronous>, transform_indices = @transform_1, window_bounds = array<i64: 256, 16>}, {pipeline_mode = #tpu.pipeline_mode<synchronous>, transform_indices = @transform_2, window_bounds = array<i64: 4, 4>}, {transform_indices = @transform_3, window_bounds = array<i64: 1, 16, 4>}]} {
    %c0 = arith.constant 0 : index
    %c0_0 = arith.constant 0 : index
    %0 = vector.load %arg3[%c0, %c0_0] : memref<256x16xbf16, #tpu.memory_space<vmem>>, vector<256x16xbf16>
    %c0_1 = arith.constant 0 : index
    %c0_2 = arith.constant 0 : index
    %1 = vector.load %arg4[%c0_1, %c0_2] : memref<4x4xbf16, #tpu.memory_space<vmem>>, vector<4x4xbf16>
    %c0_3 = arith.constant 0 : index
    %c0_4 = arith.constant 0 : index
    %c0_5 = arith.constant 0 : index
    %2 = vector.load %arg2[%c0_3, %c0_4, %c0_5] : memref<1x4x256xf32, #tpu.memory_space<vmem>>, vector<1x4x256xf32>
    %3 = vector.shape_cast %2 : vector<1x4x256xf32> to vector<4x256xf32>
    %4 = arith.truncf %3 : vector<4x256xf32> to vector<4x256xbf16>
    %cst = arith.constant dense<0.000000e+00> : vector<4x16xf32>
    %5 = tpu.matmul %4, %0, %cst {dimension_numbers = #tpu.dot_dimension_numbers<[1], [0], [0], [1], [0, 0, 1, 1], [], []>} : vector<4x256xbf16>, vector<256x16xbf16>, vector<4x16xf32> -> vector<4x16xf32>
    %cst_6 = arith.constant 6.250000e-02 : f32
    %6 = vector.broadcast %cst_6 : f32 to vector<4x16xf32>
    %7 = arith.mulf %5, %6 : vector<4x16xf32>
    %8 = arith.truncf %7 : vector<4x16xf32> to vector<4x16xbf16>
    %cst_7 = arith.constant dense<0.000000e+00> : vector<16x4xf32>
    %9 = tpu.matmul %8, %1, %cst_7 {dimension_numbers = #tpu.dot_dimension_numbers<[0], [0], [1], [1], [0, 1, 1, 1], [], []>} : vector<4x16xbf16>, vector<4x4xbf16>, vector<16x4xf32> -> vector<16x4xf32>
    %c0_8 = arith.constant 0 : index
    %c0_9 = arith.constant 0 : index
    %c0_10 = arith.constant 0 : index
    %10 = vector.load %arg5[%c0_8, %c0_9, %c0_10] : memref<1x16x4xf32, #tpu.memory_space<vmem>>, vector<1x16x4xf32>
    %11 = vector.shape_cast %10 : vector<1x16x4xf32> to vector<16x4xf32>
    %12 = vector.shape_cast %9 : vector<16x4xf32> to vector<1x16x4xf32>
    tpu.vector_store %arg5[%c0_8, %c0_9, %c0_10], %12 {strides = array<i32>} : memref<1x16x4xf32, #tpu.memory_space<vmem>>, vector<1x16x4xf32>,
    return
  }
  func.func @transform_0(%arg0: i32, %arg1: i32) -> (i32, i32, i32) {
    %c0_i32 = arith.constant 0 : i32
    %c0_i32_0 = arith.constant 0 : i32
    return %arg0, %arg1, %c0_i32 : i32, i32, i32
  }
  func.func @transform_1(%arg0: i32, %arg1: i32) -> (i32, i32) {
    %c0_i32 = arith.constant 0 : i32
    %c0_i32_0 = arith.constant 0 : i32
    %c0_i32_1 = arith.constant 0 : i32
    return %c0_i32, %c0_i32_0 : i32, i32
  }
  func.func @transform_2(%arg0: i32, %arg1: i32) -> (i32, i32) {
    %c0_i32 = arith.constant 0 : i32
    %c0_i32_0 = arith.constant 0 : i32
    %c0_i32_1 = arith.constant 0 : i32
    return %c0_i32, %c0_i32_0 : i32, i32
  }
  func.func @transform_3(%arg0: i32, %arg1: i32) -> (i32, i32, i32) {
    %c0_i32 = arith.constant 0 : i32
    %c0_i32_0 = arith.constant 0 : i32
    return %arg0, %c0_i32, %arg1 : i32, i32, i32
  }
}

</mosaic_0001>

<llo_original>
// kernel: vgg_forward.1
$region0: #{vgg_forward.1}
  #allocation0 [shape = 'u32[]', space=smem, size = 0x4, offset = 0x4, fixed_abs, tag = 'smem constant byte address 0x4 - core index']
  #allocation1 [shape = 'u32[144,128]{1,0:T(1,128)}', space=vmem, size = 0x12000, scoped, tag = 'internal scratch']
  %s0 = inlined_call_operand.vmem [shape: f32[2,4,256], index: 0, kind: input, shape index: {}]
  %s1 = inlined_call_operand.vmem [shape: bf16[256,16], index: 1, kind: input, shape index: {}]
  %s2 = inlined_call_operand.vmem [shape: bf16[4,4], index: 2, kind: input, shape index: {}]
  %s3 = inlined_call_operand.vmem [shape: f32[2,16,4], index: 3, kind: output, shape index: {}]
  %s4 = sld [smem:[#allocation0]]
  $region45: #{vgg_forward.1} parent=0
    _
  %s6 = ssub.s32 1, %s4
  %s7 = scalar_select 0, %s6, %s4
  loop: start=0, step=1, limit=4
  $region2: #{vgg_forward.1} parent=0 // loop_pre_header
    _
  $region3: #{vgg_forward.1} parent=0 // loop_header
    %s9 = sphi 0, %s13
    %p10 = scmp.ge.s32.totalorder %s9, 4
    %s16 = sphi 0, %s28
    %s17 = sphi 0, %s24
    %s18 = sphi 0, %s16
    %s19 = sphi 0, %s17
    %s20 = sphi 0, %s18
    %s21 = sphi 0, %s19
    %s33 = sphi 0, %s35
    %s36 = sphi 0, %s33
    %s37 = sphi 0, %s36
    %s53 = sphi 0, %s37
    %s57 = sphi 0, %s57
    %s59 = sphi 0, %s57
    %s60 = sphi 0, %s59
    %s74 = sphi 0, %s60
    %s78 = sphi 0, %s78
    %s80 = sphi 0, %s78
    %s81 = sphi 0, %s80
    %s95 = sphi 0, %s81
    %s103 = sphi 0, %s105
    %s106 = sphi 0, %s103
    %s107 = sphi 0, %s106
    %s123 = sphi 0, %s107
  $region4: #{vgg_forward.1} parent=0 // loop_header_branch
    %12 = sbr.rel (%p10) target = $region8
  $region5: #{vgg_forward.1} parent=0 // loop_body
    %s14 = ssub.s32 %s9, 1
    %s15 = ssub.s32 %s9, 2
    %s22 = sadd.s32 1, %s17
    %p23 = scmp.ge.s32.totalorder %s22, 1
    %s24 = scalar_select %p23, 0, %s22
    %s25 = sadd.s32 1, %s16
    %s26 = scalar_select %p23, %s25, %s16
    %p27 = scmp.ge.s32.totalorder %s26, 2
    %s28 = scalar_select %p27, 0, %s26
    %s29 = ssub.s32 %s16, %s28
    %s30 = ssub.s32 %s17, %s24
    %s31 = sor.u32 %s29, %s30
    %p32 = scmp.eq.s32.totalorder %s31, 0
    %s34 = sadd.s32 %s33, 1
    %s35 = scalar_select %p32, %s33, %s34
    %p38 = pneg %p32
    %p39 = scmp.eq.s32.totalorder %s9, 1
    %p40 = por %p38, %p39
    %p41 = scmp.ne.s32.totalorder %s33, %s36
    %p42 = scmp.eq.s32.totalorder %s9, 0
    %p43 = por %p41, %p42
    %p44 = scmp.ne.s32.totalorder %s33, %s36
    %p45 = scmp.eq.s32.totalorder %s14, 1
    %p46 = por %p44, %p45
    %p47 = scmp.ne.s32.totalorder %s36, %s37
    %p48 = scmp.eq.s32.totalorder %s14, 0
    %p49 = por %p47, %p48
    %p50 = scmp.ne.s32.totalorder %s36, %s37
    %p51 = scmp.eq.s32.totalorder %s15, 1
    %p52 = por %p50, %p51
    %p54 = scmp.ne.s32.totalorder %s37, %s53
    %p55 = scmp.eq.s32.totalorder %s15, 0
    %p56 = por %p54, %p55
    %s58 = sadd.s32 %s57, 1
    %p61 = scmp.eq.s32.totalorder %s9, 1
    %p62 = scmp.ne.s32.totalorder %s57, %s59
    %p63 = scmp.eq.s32.totalorder %s9, 0
    %p64 = por %p62, %p63
    %p65 = scmp.ne.s32.totalorder %s57, %s59
    %p66 = scmp.eq.s32.totalorder %s14, 1
    %p67 = por %p65, %p66
    %p68 = scmp.ne.s32.totalorder %s59, %s60
    %p69 = scmp.eq.s32.totalorder %s14, 0
    %p70 = por %p68, %p69
    %p71 = scmp.ne.s32.totalorder %s59, %s60
    %p72 = scmp.eq.s32.totalorder %s15, 1
    %p73 = por %p71, %p72
    %p75 = scmp.ne.s32.totalorder %s60, %s74
    %p76 = scmp.eq.s32.totalorder %s15, 0
    %p77 = por %p75, %p76
    %s79 = sadd.s32 %s78, 1
    %p82 = scmp.eq.s32.totalorder %s9, 1
    %p83 = scmp.ne.s32.totalorder %s78, %s80
    %p84 = scmp.eq.s32.totalorder %s9, 0
    %p85 = por %p83, %p84
    %p86 = scmp.ne.s32.totalorder %s78, %s80
    %p87 = scmp.eq.s32.totalorder %s14, 1
    %p88 = por %p86, %p87
    %p89 = scmp.ne.s32.totalorder %s80, %s81
    %p90 = scmp.eq.s32.totalorder %s14, 0
    %p91 = por %p89, %p90
    %p92 = scmp.ne.s32.totalorder %s80, %s81
    %p93 = scmp.eq.s32.totalorder %s15, 1
    %p94 = por %p92, %p93
    %p96 = scmp.ne.s32.totalorder %s81, %s95
    %p97 = scmp.eq.s32.totalorder %s15, 0
    %p98 = por %p96, %p97
    %s99 = ssub.s32 %s16, %s28
    %s100 = ssub.s32 %s17, %s24
    %s101 = sor.u32 %s99, %s100
    %p102 = scmp.eq.s32.totalorder %s101, 0
    %s104 = sadd.s32 %s103, 1
    %s105 = scalar_select %p102, %s103, %s104
    %p108 = pneg %p102
    %p109 = scmp.eq.s32.totalorder %s9, 1
    %p110 = por %p108, %p109
    %p111 = scmp.ne.s32.totalorder %s103, %s106
    %p112 = scmp.eq.s32.totalorder %s9, 0
    %p113 = por %p111, %p112
    %p114 = scmp.ne.s32.totalorder %s103, %s106
    %p115 = scmp.eq.s32.totalorder %s14, 1
    %p116 = por %p114, %p115
    %p117 = scmp.ne.s32.totalorder %s106, %s107
    %p118 = scmp.eq.s32.totalorder %s14, 0
    %p119 = por %p117, %p118
    %p120 = scmp.ne.s32.totalorder %s106, %s107
    %p121 = scmp.eq.s32.totalorder %s15, 1
    %p122 = por %p120, %p121
    %p124 = scmp.ne.s32.totalorder %s107, %s123
    %p125 = scmp.eq.s32.totalorder %s15, 0
    %p126 = por %p124, %p125
    %p127 = scmp.le.s32.totalorder 1, %s9
    %p128 = scmp.lt.s32.totalorder %s9, 3
    %p129 = pnand %p127, %p128
    %p130 = pneg %p129
    // Predicated region
    $region9: #{vgg_forward.1} parent=5 // pred_check
      _
    $region10: #{vgg_forward.1} parent=5 // pred_check_branch
      %132 = sbr.rel (%p129) target = $region12
    $region11: #{vgg_forward.1} parent=5 // pred_region
      %s133 = ssub.s32 %s9, 1
      // Predicated region
      $region13: #{vgg_forward.1} parent=11 // pred_check
        %p134 = pneg %p70
      $region14: #{vgg_forward.1} parent=11 // pred_check_branch
        %136 = sbr.rel (%p134) target = $region16
      $region15: #{vgg_forward.1} parent=11 // pred_region
        _
      $region16: #{vgg_forward.1} parent=11 // pred_fallthru
        _
      // Predicated region
      $region17: #{vgg_forward.1} parent=11 // pred_check
        %p137 = pneg %p91
      $region18: #{vgg_forward.1} parent=11 // pred_check_branch
        %139 = sbr.rel (%p137) target = $region20
      $region19: #{vgg_forward.1} parent=11 // pred_region
        _
      $region20: #{vgg_forward.1} parent=11 // pred_fallthru
        _
    $region12: #{vgg_forward.1} parent=5 // pred_fallthru
      _
    %p140 = scmp.lt.s32.totalorder %s9, 2
    // Predicated region
    $region21: #{vgg_forward.1} parent=5 // pred_check
      %p141 = pneg %p140
    $region22: #{vgg_forward.1} parent=5 // pred_check_branch
      %143 = sbr.rel (%p141) target = $region24
    $region23: #{vgg_forward.1} parent=5 // pred_region
      // Predicated region
      $region25: #{vgg_forward.1} parent=23 // pred_check
        %p144 = pneg %p43
      $region26: #{vgg_forward.1} parent=23 // pred_check_branch
        %146 = sbr.rel (%p144) target = $region28
      $region27: #{vgg_forward.1} parent=23 // pred_region
        %p147 = scmp.lt.s32.totalorder %s16, 1
        %s148 = scalar_select %p147, %s16, 1
        %p149 = scmp.lt.s32.totalorder %s17, 0
        %s150 = scalar_select %p149, %s17, 0
        %s151 = smul.addr %s150, 2
        %s152 = smul.addr %s148, 2
        %s153 = sadd.s32 %s151, %s152
        %s154 = smul.addr %s153, 4
        %s155 = scalar_lea.vmem %s0, %s154
      $region28: #{vgg_forward.1} parent=23 // pred_fallthru
        _
    $region24: #{vgg_forward.1} parent=5 // pred_fallthru
      _
    %p156 = scmp.le.s32.totalorder 1, %s9
    %p157 = scmp.lt.s32.totalorder %s9, 3
    %p158 = pnand %p156, %p157
    %p159 = pneg %p158
    // Predicated region
    $region29: #{vgg_forward.1} parent=5 // pred_check
      _
    $region30: #{vgg_forward.1} parent=5 // pred_check_branch
      %161 = sbr.rel (%p158) target = $region32
    $region31: #{vgg_forward.1} parent=5 // pred_region
      %s162 = ssub.s32 %s9, 1
      %p163 = scmp.lt.s32.totalorder %s18, 1
      %s164 = scalar_select %p163, %s18, 1
      %p165 = scmp.lt.s32.totalorder %s19, 0
      %s166 = scalar_select %p165, %s19, 0
      %s167 = smul.addr %s166, 2
      %s168 = smul.addr %s164, 2
      %s169 = sadd.s32 %s167, %s168
      %s170 = smul.addr %s169, 4
      %s171 = scalar_lea.vmem %s0, %s170
      %p172 = pneg %p49
      %p173 = pneg %p46
      %p174 = pneg %p70
      %p175 = pneg %p67
      %p176 = pneg %p91
      %p177 = pneg %p88
      %p178 = pneg %p119
      %p179 = pneg %p116
      %p180 = scmp.lt.s32.totalorder %s18, 1
      %s181 = scalar_select %p180, %s18, 1
      %p182 = scmp.lt.s32.totalorder %s19, 0
      %s183 = scalar_select %p182, %s19, 0
      %s184 = smul.addr %s181, 2
      %s185 = sadd.s32 %s183, %s184
      %s186 = smul.addr %s185, 8
      %s187 = scalar_lea.vmem %s3, %s186
      %p188 = scmp.lt.s32.totalorder %s18, 1
      %s189 = scalar_select %p188, %s18, 1
      %p190 = scmp.lt.s32.totalorder %s19, 0
      %s191 = scalar_select %p190, %s19, 0
      %s192 = smul.addr %s191, 2
      %s193 = smul.addr %s189, 2
      %s194 = sadd.s32 %s192, %s193
      %s195 = smul.addr %s194, 4
      %s196 = scalar_lea.vmem %s0, %s195
      %p197 = scmp.lt.s32.totalorder %s18, 1
      %s198 = scalar_select %p197, %s18, 1
      %p199 = scmp.lt.s32.totalorder %s19, 0
      %s200 = scalar_select %p199, %s19, 0
      %s201 = smul.addr %s198, 2
      %s202 = sadd.s32 %s200, %s201
      %s203 = smul.addr %s202, 8
      %s204 = scalar_lea.vmem %s3, %s203
      %v206 = vld [vmem:[%s1] sm:$0xf]
      %v207 = vld [vmem:[%s1 + $0x4] sm:$0xf]
      %v208 = vld [vmem:[%s1 + $0x8] sm:$0xf]
      %v209 = vld [vmem:[%s1 + $0xc] sm:$0xf]
      %v210 = vld [vmem:[%s1 + $0x10] sm:$0xf]
      %v211 = vld [vmem:[%s1 + $0x14] sm:$0xf]
      %v212 = vld [vmem:[%s1 + $0x18] sm:$0xf]
      %v213 = vld [vmem:[%s1 + $0x1c] sm:$0xf]
      %v214 = vld [vmem:[%s1 + $0x20] sm:$0xf]
      %v215 = vld [vmem:[%s1 + $0x24] sm:$0xf]
      %v216 = vld [vmem:[%s1 + $0x28] sm:$0xf]
      %v217 = vld [vmem:[%s1 + $0x2c] sm:$0xf]
      %v218 = vld [vmem:[%s1 + $0x30] sm:$0xf]
      %v219 = vld [vmem:[%s1 + $0x34] sm:$0xf]
      %v220 = vld [vmem:[%s1 + $0x38] sm:$0xf]
      %v221 = vld [vmem:[%s1 + $0x3c] sm:$0xf]
      %v222 = vld [vmem:[%s1 + $0x40] sm:$0xf]
      %v223 = vld [vmem:[%s1 + $0x44] sm:$0xf]
      %v224 = vld [vmem:[%s1 + $0x48] sm:$0xf]
      %v225 = vld [vmem:[%s1 + $0x4c] sm:$0xf]
      %v226 = vld [vmem:[%s1 + $0x50] sm:$0xf]
      %v227 = vld [vmem:[%s1 + $0x54] sm:$0xf]
      %v228 = vld [vmem:[%s1 + $0x58] sm:$0xf]
      %v229 = vld [vmem:[%s1 + $0x5c] sm:$0xf]
      %v230 = vld [vmem:[%s1 + $0x60] sm:$0xf]
      %v231 = vld [vmem:[%s1 + $0x64] sm:$0xf]
      %v232 = vld [vmem:[%s1 + $0x68] sm:$0xf]
      %v233 = vld [vmem:[%s1 + $0x6c] sm:$0xf]
      %v234 = vld [vmem:[%s1 + $0x70] sm:$0xf]
      %v235 = vld [vmem:[%s1 + $0x74] sm:$0xf]
      %v236 = vld [vmem:[%s1 + $0x78] sm:$0xf]
      %v237 = vld [vmem:[%s1 + $0x7c] sm:$0xf]
      %v238 = vld [vmem:[%s2] sm:$0x3]
      %v239 = vld [vmem:[%s196] sm:$0xff]
      %v241 = vcombine.high %v239, %v239
      %v243 = vpack.c.bf16 %v239, %v239
      %v244 = vpack.c.bf16 %v241, %v241
      %v277 = vunpack.c.l.b16 %v206
      %v278 = vunpack.c.l.b16 %v207
      %v279 = vunpack.c.l.b16 %v208
      %v280 = vunpack.c.l.b16 %v209
      %v281 = vunpack.c.l.b16 %v210
      %v282 = vunpack.c.l.b16 %v211
      %v283 = vunpack.c.l.b16 %v212
      %v284 = vunpack.c.l.b16 %v213
      %v285 = vunpack.c.l.b16 %v214
      %v286 = vunpack.c.l.b16 %v215
      %v287 = vunpack.c.l.b16 %v216
      %v288 = vunpack.c.l.b16 %v217
      %v289 = vunpack.c.l.b16 %v218
      %v290 = vunpack.c.l.b16 %v219
      %v291 = vunpack.c.l.b16 %v220
      %v292 = vunpack.c.l.b16 %v221
      %v293 = vunpack.c.l.b16 %v222
      %v294 = vunpack.c.l.b16 %v223
      %v295 = vunpack.c.l.b16 %v224
      %v296 = vunpack.c.l.b16 %v225
      %v297 = vunpack.c.l.b16 %v226
      %v298 = vunpack.c.l.b16 %v227
      %v299 = vunpack.c.l.b16 %v228
      %v300 = vunpack.c.l.b16 %v229
      %v301 = vunpack.c.l.b16 %v230
      %v302 = vunpack.c.l.b16 %v231
      %v303 = vunpack.c.l.b16 %v232
      %v304 = vunpack.c.l.b16 %v233
      %v305 = vunpack.c.l.b16 %v234
      %v306 = vunpack.c.l.b16 %v235
      %v307 = vunpack.c.l.b16 %v236
      %v308 = vunpack.c.l.b16 %v237
      %v309 = vpack.c.b16 %v278, %v277
      %v310 = vpack.c.b16 %v280, %v279
      %v311 = vpack.c.b16 %v282, %v281
      %v312 = vpack.c.b16 %v284, %v283
      %v313 = vpack.c.b16 %v286, %v285
      %v314 = vpack.c.b16 %v288, %v287
      %v315 = vpack.c.b16 %v290, %v289
      %v316 = vpack.c.b16 %v292, %v291
      %v317 = vpack.c.b16 %v294, %v293
      %v318 = vpack.c.b16 %v296, %v295
      %v319 = vpack.c.b16 %v298, %v297
      %v320 = vpack.c.b16 %v300, %v299
      %v321 = vpack.c.b16 %v302, %v301
      %v322 = vpack.c.b16 %v304, %v303
      %v323 = vpack.c.b16 %v306, %v305
      %v324 = vpack.c.b16 %v308, %v307
      %341 = vmatprep.subr.bf16.mxu0 0
      %342 = vmatpush1.bf16.msra.mxu0 %v316
      %343 = vmatprep.subr.bf16.mxu0 0
      %344 = vmatpush1.bf16.msra.mxu0 %v315
      %345 = vmatprep.subr.bf16.mxu0 0
      %346 = vmatpush1.bf16.msra.mxu0 %v314
      %347 = vmatprep.subr.bf16.mxu0 0
      %348 = vmatpush1.bf16.msra.mxu0 %v313
      %349 = vmatprep.subr.bf16.mxu0 0
      %350 = vmatpush1.bf16.msra.mxu0 %v312
      %351 = vmatprep.subr.bf16.mxu0 0
      %352 = vmatpush1.bf16.msra.mxu0 %v311
      %353 = vmatprep.subr.bf16.mxu0 0
      %354 = vmatpush1.bf16.msra.mxu0 %v310
      %355 = vmatprep.subr.bf16.mxu0 0
      %356 = vmatpush1.bf16.msra.mxu0 %v309
      %357 = vmatprep.subr.bf16.mxu0 0
      %358 = vmatpush2.bf16.msra.mxu0 %v324
      %359 = vmatprep.subr.bf16.mxu0 0
      %360 = vmatpush2.bf16.msra.mxu0 %v323
      %361 = vmatprep.subr.bf16.mxu0 0
      %362 = vmatpush2.bf16.msra.mxu0 %v322
      %363 = vmatprep.subr.bf16.mxu0 0
      %364 = vmatpush2.bf16.msra.mxu0 %v321
      %365 = vmatprep.subr.bf16.mxu0 0
      %366 = vmatpush2.bf16.msra.mxu0 %v320
      %367 = vmatprep.subr.bf16.mxu0 0
      %368 = vmatpush2.bf16.msra.mxu0 %v319
      %369 = vmatprep.subr.bf16.mxu0 0
      %370 = vmatpush2.bf16.msra.mxu0 %v318
      %371 = vmatprep.subr.bf16.mxu0 0
      %372 = vmatpush2.bf16.msra.mxu0 %v317
      %373 = vmatprep.mubr.bf16.mxu0 %v244
      %374 = vmatmul.mubr.bf16.gmra.mxu0 %v243
      %v375 = vpop.f32.mrf.mxu0
      %v376 = vadd.f32 0.0, %v375
      %v377 = vpop.f32.mrf.mxu0
      %v378 = vpop.f32.mrf.mxu0
      %v379 = vpop.f32.mrf.mxu0
      %380 = vdwg.mxu0
      %v381 = vmul.f32 %v376, 0.0625
      %v382 = vpack.c.bf16 %v381, %v381
      %383 = vxpose.xlu0.c.b16.start [1/8] %v382, 128
      %384 = vxpose.xlu0.c.b16.cont [2/8] 0, 128
      %385 = vxpose.xlu0.c.b16.cont [3/8] 0, 128
      %386 = vxpose.xlu0.c.b16.cont [4/8] 0, 128
      %387 = vxpose.xlu0.c.b16.cont [5/8] 0, 128
      %388 = vxpose.xlu0.c.b16.cont [6/8] 0, 128
      %389 = vxpose.xlu0.c.b16.cont [7/8] 0, 128
      %390 = vxpose.xlu0.c.b16.end [8/8] 0, 128
      %v391 = vpop.trf.xlu0
      %v392 = vpop.trf.xlu0
      %v393 = vpop.trf.xlu0
      %v394 = vpop.trf.xlu0
      %v395 = vpop.trf.xlu0
      %v396 = vpop.trf.xlu0
      %v397 = vpop.trf.xlu0
      %v398 = vpop.trf.xlu0
      %vm399 = vcmask 31744
      %v401 = vsel %vm399, %v391, 0
      %vm403 = vcmask 1041408
      %v405 = vsel %vm403, %v238, 0
      %407 = vmatprep.subr.bf16.mxu0 0
      %408 = vmatpush1.bf16.msra.mxu0 0
      %409 = vmatprep.subr.bf16.mxu0 0
      %410 = vmatpush1.bf16.msra.mxu0 0
      %411 = vmatprep.subr.bf16.mxu0 0
      %412 = vmatpush1.bf16.msra.mxu0 0
      %413 = vmatprep.subr.bf16.mxu0 0
      %414 = vmatpush1.bf16.msra.mxu0 0
      %415 = vmatprep.subr.bf16.mxu0 0
      %416 = vmatpush1.bf16.msra.mxu0 0
      %417 = vmatprep.subr.bf16.mxu0 0
      %418 = vmatpush1.bf16.msra.mxu0 0
      %419 = vmatprep.subr.bf16.mxu0 0
      %420 = vmatpush1.bf16.msra.mxu0 0
      %421 = vmatprep.subr.bf16.mxu0 0
      %422 = vmatpush1.bf16.msra.mxu0 %v405
      %423 = vmatprep.subr.bf16.mxu0 0
      %424 = vmatpush2.bf16.msra.mxu0 0
      %425 = vmatprep.subr.bf16.mxu0 0
      %426 = vmatpush2.bf16.msra.mxu0 0
      %427 = vmatprep.subr.bf16.mxu0 0
      %428 = vmatpush2.bf16.msra.mxu0 0
      %429 = vmatprep.subr.bf16.mxu0 0
      %430 = vmatpush2.bf16.msra.mxu0 0
      %431 = vmatprep.subr.bf16.mxu0 0
      %432 = vmatpush2.bf16.msra.mxu0 0
      %433 = vmatprep.subr.bf16.mxu0 0
      %434 = vmatpush2.bf16.msra.mxu0 0
      %435 = vmatprep.subr.bf16.mxu0 0
      %436 = vmatpush2.bf16.msra.mxu0 0
      %437 = vmatprep.subr.bf16.mxu0 0
      %438 = vmatpush2.bf16.msra.mxu0 0
      %439 = vmatprep.mubr.bf16.mxu0 0
      %440 = vmatmul.mubr.bf16.gmra.mxu0 %v401
      %v441 = vpop.f32.mrf.mxu0
      %v442 = vadd.f32 0.0, %v441
      %v443 = vpop.f32.mrf.mxu0
      %v444 = vpop.f32.mrf.mxu0
      %v445 = vadd.f32 0.0, %v444
      %v446 = vpop.f32.mrf.mxu0
      %447 = vdwg.mxu0
      %448 = vst.msk [vmem:[%s204] sm:$0xff] %vm399, %v442
      %449 = vst.msk [vmem:[%s204 + $0x8] sm:$0xff] %vm399, %v445
      %p450 = scmp.lt.s32.totalorder %s18, 1
      %s451 = scalar_select %p450, %s18, 1
      %p452 = scmp.lt.s32.totalorder %s19, 0
      %s453 = scalar_select %p452, %s19, 0
      %s454 = smul.addr %s451, 2
      %s455 = sadd.s32 %s453, %s454
      %s456 = smul.addr %s455, 8
      %s457 = scalar_lea.vmem %s3, %s456
      // Predicated region
      $region33: #{vgg_forward.1} parent=31 // pred_check
        %p458 = pneg %p116
      $region34: #{vgg_forward.1} parent=31 // pred_check_branch
        %460 = sbr.rel (%p458) target = $region36
      $region35: #{vgg_forward.1} parent=31 // pred_region
        _
      $region36: #{vgg_forward.1} parent=31 // pred_fallthru
        _
    $region32: #{vgg_forward.1} parent=5 // pred_fallthru
      _
    %p461 = scmp.le.s32.totalorder 2, %s9
    // Predicated region
    $region37: #{vgg_forward.1} parent=5 // pred_check
      %p462 = pneg %p461
    $region38: #{vgg_forward.1} parent=5 // pred_check_branch
      %464 = sbr.rel (%p462) target = $region40
    $region39: #{vgg_forward.1} parent=5 // pred_region
      %s465 = ssub.s32 %s9, 2
      // Predicated region
      $region41: #{vgg_forward.1} parent=39 // pred_check
        %p466 = pneg %p122
      $region42: #{vgg_forward.1} parent=39 // pred_check_branch
        %468 = sbr.rel (%p466) target = $region44
      $region43: #{vgg_forward.1} parent=39 // pred_region
        %p469 = scmp.lt.s32.totalorder %s20, 1
        %s470 = scalar_select %p469, %s20, 1
        %p471 = scmp.lt.s32.totalorder %s21, 0
        %s472 = scalar_select %p471, %s21, 0
        %s473 = smul.addr %s470, 2
        %s474 = sadd.s32 %s472, %s473
        %s475 = smul.addr %s474, 8
        %s476 = scalar_lea.vmem %s3, %s475
      $region44: #{vgg_forward.1} parent=39 // pred_fallthru
        _
    $region40: #{vgg_forward.1} parent=5 // pred_fallthru
      _
  $region6: #{vgg_forward.1} parent=0 // loop_footer
    %s13 = sadd.s32 1, %s9
  $region7: #{vgg_forward.1} parent=0 // loop_footer_branch
    %8 = sbr.rel target = $region3
  $region8: #{vgg_forward.1} parent=0 // loop_exit
    _

</llo_original>
